<compile_context>
chip_gen: v7x
topology: tpu7x:2x2x1
jax: 0.10.0
libtpu: 0.0.40
codegen_flags: <defaults>
</compile_context>

<pallas_src>
import functools

import jax
import jax.numpy as jnp
from jax.experimental import pallas as pl
from jax.experimental.pallas import tpu as pltpu

# dtype of the big MXU matmul operands (accumulation is always f32).
# Set to jnp.float32 to recover exact-f32 numerics on any generation.
_MXU_DTYPE = jnp.bfloat16


# ----------------------------------------------------------------------------
# Fused Pallas kernel (one batch element per grid step)
# ----------------------------------------------------------------------------
def _inception_kernel(x_ref, w1_ref, b1_ref, wb_ref, bb_ref, o_ref,
                      x1_pad_ref, xp_pad_ref, *, kmax, pool_size):
    # x_ref      (Cin, L)           input slice, NCL (channels=sublanes, L=lanes)
    # w1_ref     (nf, Cin)          BN-scaled conv1x1 weight (f32)
    # b1_ref     (nf, 1)            folded BN bias for conv1x1 (f32)
    # wb_ref     (3*nf, Kmax*nf)    packed BN-scaled branch weights (bf16/f32)
    # bb_ref     (3*nf, 1)          folded BN biases for the 3 branches (f32)
    # o_ref      (4*nf, L)          out = relu([branch0|branch1|branch2|maxpool])
    # x1_pad_ref (nf, L+2*(Kmax//2))    scratch: zero-padded x1 ('same' conv pad)
    # xp_pad_ref (Cin, L+2*(pool//2))   scratch: -inf padded x (maxpool pad)
    nf = w1_ref.shape[0]
    L = x_ref.shape[1]
    pmax = kmax // 2
    pp = pool_size // 2

    x = x_ref[...].astype(jnp.float32)                           # (Cin, L)

    # --- bottleneck: X1x1 = relu(bn(conv1x1(X)))  (BN folded into w1/b1) ----
    x1 = jnp.dot(w1_ref[...], x, preferred_element_type=jnp.float32)   # (nf, L)
    x1 = jnp.maximum(x1 + b1_ref[...], 0.0)
    # (Dropout(p=0.3) after X1x1 is an eval-mode identity.)

    # --- in-kernel 'same' zero padding of x1 along the length (lane) axis ---
    x1_pad_ref[...] = jnp.zeros_like(x1_pad_ref)
    x1_pad_ref[:, pmax:pmax + L] = x1
    x1p = x1_pad_ref[...]                                        # (nf, L + 2*pmax)

    # --- all three branch convs as ONE matmul (im2col over Kmax taps) -------
    # cols[k*nf + c, l] = x1[c, l + k - pmax]   (zero outside [0, L))
    cols = jnp.concatenate([x1p[:, k:k + L] for k in range(kmax)], axis=0)
    yb = jnp.dot(wb_ref[...], cols.astype(wb_ref.dtype),
                 preferred_element_type=jnp.float32)             # (3*nf, L)
    yb = jnp.maximum(yb + bb_ref[...], 0.0)       # relu(cat(.)) == cat(relu(.))

    # --- maxpool branch: relu(bn(conv1x1(maxpool(X)))) ----------------------
    xp_pad_ref[...] = jnp.full_like(xp_pad_ref, -jnp.inf)
    xp_pad_ref[:, pp:pp + L] = x
    xpp = xp_pad_ref[...]                                        # (Cin, L + 2*pp)
    pooled = xpp[:, 0:L]
    for p in range(1, pool_size):                                # VPU filler work
        pooled = jnp.maximum(pooled, xpp[:, p:p + L])
    ym = jnp.dot(w1_ref[...], pooled, preferred_element_type=jnp.float32)
    ym = jnp.maximum(ym + b1_ref[...], 0.0)                      # (nf, L)

    # channel concat written directly in NCL (no XLA concat / transpose).
    o_ref[...] = jnp.concatenate([yb, ym], axis=0).astype(o_ref.dtype)


# ----------------------------------------------------------------------------
# Wrapper: BN folding, weight packing, pallas_call
# ----------------------------------------------------------------------------
def inception_forward(x_ncl, params, *, pooling_size, kernel_sizes=(11, 21, 41)):
    """Inception block forward (eval mode, stride=1) as a single fused kernel.

    x_ncl: (B, in_channels, L) PyTorch NCL input.  Returns (B, 4*n_filters, L).
    """
    B, cin, L = x_ncl.shape
    nf = int(params["conv1x1_b"].shape[0])
    nb = len(kernel_sizes)
    kmax = max(kernel_sizes)
    pmax = kmax // 2
    pp = pooling_size // 2
    assert all(ks % 2 == 1 for ks in kernel_sizes) and pooling_size % 2 == 1, (
        "'same'-length fusion assumes odd kernel / pooling sizes")

    # ---- fold eval-mode BatchNorm into weights (scale) and biases (shift) ---
    eps = 1e-5
    scale = params["bn_gamma"] / jnp.sqrt(params["bn_var"] + eps)        # (nf,)
    shift = params["bn_beta"] - params["bn_mean"] * scale                # (nf,)

    # conv1x1: torch weight (nf, Cin, 1) -> BN-scaled (nf, Cin)
    w1 = (params["conv1x1_w"][:, :, 0] * scale[:, None]).astype(jnp.float32)
    b1 = (params["conv1x1_b"] * scale + shift).reshape(nf, 1).astype(jnp.float32)

    # branch convs: torch weights (nf, nf, ks) -> ONE packed (3*nf, Kmax*nf)
    # matrix, BN-scaled, with each branch's tap j placed at im2col tap
    # k = j + (Kmax//2 - ks//2) so a single matmul evaluates all branches.
    wp = jnp.zeros((nb * nf, kmax * nf), jnp.float32)
    for i, ks in enumerate(kernel_sizes):
        w = params["branch_w"][i] * scale[:, None, None]                 # (nf, nf, ks)
        w = jnp.transpose(w, (0, 2, 1)).reshape(nf, ks * nf)             # [co, j*nf+ci]
        col0 = (pmax - ks // 2) * nf
        wp = wp.at[i * nf:(i + 1) * nf, col0:col0 + ks * nf].set(w)
    wp = wp.astype(_MXU_DTYPE)
    bb = jnp.concatenate([params["branch_b"][i] * scale + shift for i in range(nb)])
    bb = bb.reshape(nb * nf, 1).astype(jnp.float32)

    cout = (nb + 1) * nf
    kernel = functools.partial(_inception_kernel, kmax=kmax, pool_size=pooling_size)
    return pl.pallas_call(
        kernel,
        out_shape=jax.ShapeDtypeStruct((B, cout, L), x_ncl.dtype),
        grid_spec=pltpu.PrefetchScalarGridSpec(
            num_scalar_prefetch=0,
            grid=(B,),
            in_specs=[
                pl.BlockSpec((None, cin, L), lambda b: (b, 0, 0)),        # x (NCL)
                pl.BlockSpec((nf, cin), lambda b: (0, 0)),                # w1
                pl.BlockSpec((nf, 1), lambda b: (0, 0)),                  # b1
                pl.BlockSpec((nb * nf, kmax * nf), lambda b: (0, 0)),     # packed W
                pl.BlockSpec((nb * nf, 1), lambda b: (0, 0)),             # packed b
            ],
            out_specs=pl.BlockSpec((None, cout, L), lambda b: (b, 0, 0)),
            scratch_shapes=[
                pltpu.VMEM((nf, L + 2 * pmax), jnp.float32),   # zero-padded x1
                pltpu.VMEM((cin, L + 2 * pp), jnp.float32),    # -inf padded x
            ],
        ),
        compiler_params=pltpu.CompilerParams(
            dimension_semantics=("parallel",),         # batch across megacore TCs
            vmem_limit_bytes=32 * 1024 * 1024,         # well under v7x's 64 MiB
        ),
    )(x_ncl, w1, b1, wp, bb)


# ----------------------------------------------------------------------------
# Deterministic synthetic parameters (PyTorch layouts)
# ----------------------------------------------------------------------------
def init_inception_params(key, in_channels, n_filters, kernel_sizes=(11, 21, 41)):
    nb = len(kernel_sizes)
    keys = jax.random.split(key, 6 + 2 * nb)
    p = {}
    p["conv1x1_w"] = 0.1 * jax.random.normal(
        keys[0], (n_filters, in_channels, 1), jnp.float32)
    p["conv1x1_b"] = 0.1 * jax.random.normal(keys[1], (n_filters,), jnp.float32)
    p["branch_w"] = [
        0.1 * jax.random.normal(keys[2 + 2 * i], (n_filters, n_filters, ks), jnp.float32)
        for i, ks in enumerate(kernel_sizes)]
    p["branch_b"] = [
        0.1 * jax.random.normal(keys[3 + 2 * i], (n_filters,), jnp.float32)
        for i in range(nb)]
    base = 2 + 2 * nb
    p["bn_gamma"] = 1.0 + 0.1 * jax.random.normal(keys[base + 0], (n_filters,), jnp.float32)
    p["bn_beta"] = 0.1 * jax.random.normal(keys[base + 1], (n_filters,), jnp.float32)
    p["bn_mean"] = 0.1 * jax.random.normal(keys[base + 2], (n_filters,), jnp.float32)
    p["bn_var"] = 0.5 + jnp.abs(jax.random.normal(keys[base + 3], (n_filters,), jnp.float32))
    return p


# ----------------------------------------------------------------------------
# Pure-JAX (XLA) reference for a numerical self-check
# ----------------------------------------------------------------------------
def _reference_forward(x, params, *, pooling_size, kernel_sizes):
    eps = 1e-5
    scale = params["bn_gamma"] / jnp.sqrt(params["bn_var"] + eps)

    def bn(y):
        return (scale[None, :, None] * (y - params["bn_mean"][None, :, None])
                + params["bn_beta"][None, :, None])

    def conv(inp, w, b, pad):
        y = jax.lax.conv_general_dilated(
            inp, w, window_strides=(1,), padding=[(pad, pad)],
            dimension_numbers=("NCH", "OIH", "NCH"))
        return y + b[None, :, None]

    L = x.shape[2]
    x1 = jax.nn.relu(bn(conv(x, params["conv1x1_w"], params["conv1x1_b"], 0)))
    outs = [bn(conv(x1, params["branch_w"][i], params["branch_b"][i], ks // 2))
            for i, ks in enumerate(kernel_sizes)]
    pp = pooling_size // 2
    xp = jnp.pad(x, ((0, 0), (0, 0), (pp, pp)), constant_values=-jnp.inf)
    pooled = xp[:, :, 0:L]
    for p_ in range(1, pooling_size):
        pooled = jnp.maximum(pooled, xp[:, :, p_:p_ + L])
    outs.append(bn(conv(pooled, params["conv1x1_w"], params["conv1x1_b"], 0)))
    return jax.nn.relu(jnp.concatenate(outs, axis=1))


# ----------------------------------------------------------------------------
if __name__ == "__main__":
    B, C_IN, L = 2, 4, 64
    N_FILTERS = 8
    POOLING_SIZE = 3
    KERNEL_SIZES = (11, 21, 41)

    key = jax.random.PRNGKey(0)
    k_x, k_p = jax.random.split(key)
    x = jax.random.normal(k_x, (B, C_IN, L), jnp.float32)      # PyTorch NCL input
    params = init_inception_params(k_p, C_IN, N_FILTERS, KERNEL_SIZES)

    fwd = jax.jit(functools.partial(
        inception_forward, pooling_size=POOLING_SIZE, kernel_sizes=KERNEL_SIZES))
    out = fwd(x, params)
    jax.block_until_ready(out)

    assert out.shape == (B, 4 * N_FILTERS, L), out.shape
    assert bool(jnp.all(out >= 0.0))                           # final ReLU

    ref = _reference_forward(x, params, pooling_size=POOLING_SIZE,
                             kernel_sizes=KERNEL_SIZES)
    err = float(jnp.max(jnp.abs(out - ref)))
    assert err < 1e-1, f"max |pallas - reference| = {err}"     # bf16-MXU tolerance
    print("KERNEL_OK")
</pallas_src>

<mosaic_0001>
module attributes {stable_mosaic.version = 11 : i64} {
  func.func @_inception_kernel(%arg0: i32, %arg1: memref<1x4x64xf32, #tpu.memory_space<vmem>>, %arg2: memref<8x4xf32, #tpu.memory_space<vmem>>, %arg3: memref<8x1xf32, #tpu.memory_space<vmem>>, %arg4: memref<24x328xbf16, #tpu.memory_space<vmem>>, %arg5: memref<24x1xf32, #tpu.memory_space<vmem>>, %arg6: memref<1x32x64xf32, #tpu.memory_space<vmem>>, %arg7: memref<8x104xf32, #tpu.memory_space<vmem>>, %arg8: memref<4x66xf32, #tpu.memory_space<vmem>>) attributes {dimension_semantics = [#tpu.dimension_semantics<parallel>], iteration_bounds = array<i64: 2>, scalar_prefetch = 0 : i64, scratch_operands = 2 : i64, tpu.core_type = #tpu.core_type<tc>, window_params = [{transform_indices = @transform_0, window_bounds = array<i64: 1, 4, 64>}, {pipeline_mode = #tpu.pipeline_mode<synchronous>, transform_indices = @transform_1, window_bounds = array<i64: 8, 4>}, {pipeline_mode = #tpu.pipeline_mode<synchronous>, transform_indices = @transform_2, window_bounds = array<i64: 8, 1>}, {pipeline_mode = #tpu.pipeline_mode<synchronous>, transform_indices = @transform_3, window_bounds = array<i64: 24, 328>}, {pipeline_mode = #tpu.pipeline_mode<synchronous>, transform_indices = @transform_4, window_bounds = array<i64: 24, 1>}, {transform_indices = @transform_5, window_bounds = array<i64: 1, 32, 64>}]} {
    %c0 = arith.constant 0 : index
    %c0_0 = arith.constant 0 : index
    %c0_1 = arith.constant 0 : index
    %0 = vector.load %arg1[%c0, %c0_0, %c0_1] : memref<1x4x64xf32, #tpu.memory_space<vmem>>, vector<1x4x64xf32>
    %1 = vector.shape_cast %0 : vector<1x4x64xf32> to vector<4x64xf32>
    %c0_2 = arith.constant 0 : index
    %c0_3 = arith.constant 0 : index
    %2 = vector.load %arg2[%c0_2, %c0_3] : memref<8x4xf32, #tpu.memory_space<vmem>>, vector<8x4xf32>
    %cst = arith.constant dense<0.000000e+00> : vector<8x64xf32>
    %3 = tpu.matmul %2, %1, %cst {dimension_numbers = #tpu.dot_dimension_numbers<[1], [0], [0], [1], [0, 0, 1, 1], [], []>} : vector<8x4xf32>, vector<4x64xf32>, vector<8x64xf32> -> vector<8x64xf32>
    %c0_4 = arith.constant 0 : index
    %c0_5 = arith.constant 0 : index
    %4 = vector.load %arg3[%c0_4, %c0_5] : memref<8x1xf32, #tpu.memory_space<vmem>>, vector<8x1xf32>
    %5 = vector.broadcast %4 : vector<8x1xf32> to vector<8x64xf32>
    %6 = arith.addf %3, %5 : vector<8x64xf32>
    %cst_6 = arith.constant 0.000000e+00 : f32
    %7 = vector.broadcast %cst_6 : f32 to vector<8x64xf32>
    %8 = arith.maximumf %6, %7 : vector<8x64xf32>
    %cst_7 = arith.constant 0.000000e+00 : f32
    %9 = vector.broadcast %cst_7 : f32 to vector<8x104xf32>
    %c0_8 = arith.constant 0 : index
    %c0_9 = arith.constant 0 : index
    %10 = vector.load %arg7[%c0_8, %c0_9] : memref<8x104xf32, #tpu.memory_space<vmem>>, vector<8x104xf32>
    tpu.vector_store %arg7[%c0_8, %c0_9], %9 {strides = array<i32>} : memref<8x104xf32, #tpu.memory_space<vmem>>, vector<8x104xf32>,
    %c0_10 = arith.constant 0 : index
    %c20 = arith.constant 20 : index
    %11 = vector.load %arg7[%c0_10, %c20] : memref<8x104xf32, #tpu.memory_space<vmem>>, vector<8x64xf32>
    tpu.vector_store %arg7[%c0_10, %c20], %8 {strides = array<i32>} : memref<8x104xf32, #tpu.memory_space<vmem>>, vector<8x64xf32>,
    %c0_11 = arith.constant 0 : index
    %c0_12 = arith.constant 0 : index
    %12 = vector.load %arg7[%c0_11, %c0_12] : memref<8x104xf32, #tpu.memory_space<vmem>>, vector<8x104xf32>
    %13 = vector.extract_strided_slice %12 {offsets = [0, 0], sizes = [8, 64], strides = [1, 1]} : vector<8x104xf32> to vector<8x64xf32>
    %14 = vector.extract_strided_slice %12 {offsets = [0, 1], sizes = [8, 64], strides = [1, 1]} : vector<8x104xf32> to vector<8x64xf32>
    %15 = vector.extract_strided_slice %12 {offsets = [0, 2], sizes = [8, 64], strides = [1, 1]} : vector<8x104xf32> to vector<8x64xf32>
    %16 = vector.extract_strided_slice %12 {offsets = [0, 3], sizes = [8, 64], strides = [1, 1]} : vector<8x104xf32> to vector<8x64xf32>
    %17 = vector.extract_strided_slice %12 {offsets = [0, 4], sizes = [8, 64], strides = [1, 1]} : vector<8x104xf32> to vector<8x64xf32>
    %18 = vector.extract_strided_slice %12 {offsets = [0, 5], sizes = [8, 64], strides = [1, 1]} : vector<8x104xf32> to vector<8x64xf32>
    %19 = vector.extract_strided_slice %12 {offsets = [0, 6], sizes = [8, 64], strides = [1, 1]} : vector<8x104xf32> to vector<8x64xf32>
    %20 = vector.extract_strided_slice %12 {offsets = [0, 7], sizes = [8, 64], strides = [1, 1]} : vector<8x104xf32> to vector<8x64xf32>
    %21 = vector.extract_strided_slice %12 {offsets = [0, 8], sizes = [8, 64], strides = [1, 1]} : vector<8x104xf32> to vector<8x64xf32>
    %22 = vector.extract_strided_slice %12 {offsets = [0, 9], sizes = [8, 64], strides = [1, 1]} : vector<8x104xf32> to vector<8x64xf32>
    %23 = vector.extract_strided_slice %12 {offsets = [0, 10], sizes = [8, 64], strides = [1, 1]} : vector<8x104xf32> to vector<8x64xf32>
    %24 = vector.extract_strided_slice %12 {offsets = [0, 11], sizes = [8, 64], strides = [1, 1]} : vector<8x104xf32> to vector<8x64xf32>
    %25 = vector.extract_strided_slice %12 {offsets = [0, 12], sizes = [8, 64], strides = [1, 1]} : vector<8x104xf32> to vector<8x64xf32>
    %26 = vector.extract_strided_slice %12 {offsets = [0, 13], sizes = [8, 64], strides = [1, 1]} : vector<8x104xf32> to vector<8x64xf32>
    %27 = vector.extract_strided_slice %12 {offsets = [0, 14], sizes = [8, 64], strides = [1, 1]} : vector<8x104xf32> to vector<8x64xf32>
    %28 = vector.extract_strided_slice %12 {offsets = [0, 15], sizes = [8, 64], strides = [1, 1]} : vector<8x104xf32> to vector<8x64xf32>
    %29 = vector.extract_strided_slice %12 {offsets = [0, 16], sizes = [8, 64], strides = [1, 1]} : vector<8x104xf32> to vector<8x64xf32>
    %30 = vector.extract_strided_slice %12 {offsets = [0, 17], sizes = [8, 64], strides = [1, 1]} : vector<8x104xf32> to vector<8x64xf32>
    %31 = vector.extract_strided_slice %12 {offsets = [0, 18], sizes = [8, 64], strides = [1, 1]} : vector<8x104xf32> to vector<8x64xf32>
    %32 = vector.extract_strided_slice %12 {offsets = [0, 19], sizes = [8, 64], strides = [1, 1]} : vector<8x104xf32> to vector<8x64xf32>
    %33 = vector.extract_strided_slice %12 {offsets = [0, 20], sizes = [8, 64], strides = [1, 1]} : vector<8x104xf32> to vector<8x64xf32>
    %34 = vector.extract_strided_slice %12 {offsets = [0, 21], sizes = [8, 64], strides = [1, 1]} : vector<8x104xf32> to vector<8x64xf32>
    %35 = vector.extract_strided_slice %12 {offsets = [0, 22], sizes = [8, 64], strides = [1, 1]} : vector<8x104xf32> to vector<8x64xf32>
    %36 = vector.extract_strided_slice %12 {offsets = [0, 23], sizes = [8, 64], strides = [1, 1]} : vector<8x104xf32> to vector<8x64xf32>
    %37 = vector.extract_strided_slice %12 {offsets = [0, 24], sizes = [8, 64], strides = [1, 1]} : vector<8x104xf32> to vector<8x64xf32>
    %38 = vector.extract_strided_slice %12 {offsets = [0, 25], sizes = [8, 64], strides = [1, 1]} : vector<8x104xf32> to vector<8x64xf32>
    %39 = vector.extract_strided_slice %12 {offsets = [0, 26], sizes = [8, 64], strides = [1, 1]} : vector<8x104xf32> to vector<8x64xf32>
    %40 = vector.extract_strided_slice %12 {offsets = [0, 27], sizes = [8, 64], strides = [1, 1]} : vector<8x104xf32> to vector<8x64xf32>
    %41 = vector.extract_strided_slice %12 {offsets = [0, 28], sizes = [8, 64], strides = [1, 1]} : vector<8x104xf32> to vector<8x64xf32>
    %42 = vector.extract_strided_slice %12 {offsets = [0, 29], sizes = [8, 64], strides = [1, 1]} : vector<8x104xf32> to vector<8x64xf32>
    %43 = vector.extract_strided_slice %12 {offsets = [0, 30], sizes = [8, 64], strides = [1, 1]} : vector<8x104xf32> to vector<8x64xf32>
    %44 = vector.extract_strided_slice %12 {offsets = [0, 31], sizes = [8, 64], strides = [1, 1]} : vector<8x104xf32> to vector<8x64xf32>
    %45 = vector.extract_strided_slice %12 {offsets = [0, 32], sizes = [8, 64], strides = [1, 1]} : vector<8x104xf32> to vector<8x64xf32>
    %46 = vector.extract_strided_slice %12 {offsets = [0, 33], sizes = [8, 64], strides = [1, 1]} : vector<8x104xf32> to vector<8x64xf32>
    %47 = vector.extract_strided_slice %12 {offsets = [0, 34], sizes = [8, 64], strides = [1, 1]} : vector<8x104xf32> to vector<8x64xf32>
    %48 = vector.extract_strided_slice %12 {offsets = [0, 35], sizes = [8, 64], strides = [1, 1]} : vector<8x104xf32> to vector<8x64xf32>
    %49 = vector.extract_strided_slice %12 {offsets = [0, 36], sizes = [8, 64], strides = [1, 1]} : vector<8x104xf32> to vector<8x64xf32>
    %50 = vector.extract_strided_slice %12 {offsets = [0, 37], sizes = [8, 64], strides = [1, 1]} : vector<8x104xf32> to vector<8x64xf32>
    %51 = vector.extract_strided_slice %12 {offsets = [0, 38], sizes = [8, 64], strides = [1, 1]} : vector<8x104xf32> to vector<8x64xf32>
    %52 = vector.extract_strided_slice %12 {offsets = [0, 39], sizes = [8, 64], strides = [1, 1]} : vector<8x104xf32> to vector<8x64xf32>
    %53 = vector.extract_strided_slice %12 {offsets = [0, 40], sizes = [8, 64], strides = [1, 1]} : vector<8x104xf32> to vector<8x64xf32>
    %54 = tpu.concatenate %13, %14, %15, %16, %17, %18, %19, %20, %21, %22, %23, %24, %25, %26, %27, %28 in 0 : vector<8x64xf32>, vector<8x64xf32>, vector<8x64xf32>, vector<8x64xf32>, vector<8x64xf32>, vector<8x64xf32>, vector<8x64xf32>, vector<8x64xf32>, vector<8x64xf32>, vector<8x64xf32>, vector<8x64xf32>, vector<8x64xf32>, vector<8x64xf32>, vector<8x64xf32>, vector<8x64xf32>, vector<8x64xf32> -> vector<128x64xf32>
    %55 = tpu.concatenate %29, %30, %31, %32, %33, %34, %35, %36, %37, %38, %39, %40, %41, %42, %43, %44 in 0 : vector<8x64xf32>, vector<8x64xf32>, vector<8x64xf32>, vector<8x64xf32>, vector<8x64xf32>, vector<8x64xf32>, vector<8x64xf32>, vector<8x64xf32>, vector<8x64xf32>, vector<8x64xf32>, vector<8x64xf32>, vector<8x64xf32>, vector<8x64xf32>, vector<8x64xf32>, vector<8x64xf32>, vector<8x64xf32> -> vector<128x64xf32>
    %56 = tpu.concatenate %45, %46, %47, %48, %49, %50, %51, %52, %53 in 0 : vector<8x64xf32>, vector<8x64xf32>, vector<8x64xf32>, vector<8x64xf32>, vector<8x64xf32>, vector<8x64xf32>, vector<8x64xf32>, vector<8x64xf32>, vector<8x64xf32> -> vector<72x64xf32>
    %57 = tpu.concatenate %54, %55, %56 in 0 : vector<128x64xf32>, vector<128x64xf32>, vector<72x64xf32> -> vector<328x64xf32>
    %c0_13 = arith.constant 0 : index
    %c0_14 = arith.constant 0 : index
    %58 = vector.load %arg4[%c0_13, %c0_14] : memref<24x328xbf16, #tpu.memory_space<vmem>>, vector<24x328xbf16>
    %59 = arith.truncf %57 : vector<328x64xf32> to vector<328x64xbf16>
    %cst_15 = arith.constant dense<0.000000e+00> : vector<24x64xf32>
    %60 = tpu.matmul %58, %59, %cst_15 {dimension_numbers = #tpu.dot_dimension_numbers<[1], [0], [0], [1], [0, 0, 1, 1], [], []>} : vector<24x328xbf16>, vector<328x64xbf16>, vector<24x64xf32> -> vector<24x64xf32>
    %c0_16 = arith.constant 0 : index
    %c0_17 = arith.constant 0 : index
    %61 = vector.load %arg5[%c0_16, %c0_17] : memref<24x1xf32, #tpu.memory_space<vmem>>, vector<24x1xf32>
    %62 = vector.broadcast %61 : vector<24x1xf32> to vector<24x64xf32>
    %63 = arith.addf %60, %62 : vector<24x64xf32>
    %cst_18 = arith.constant 0.000000e+00 : f32
    %64 = vector.broadcast %cst_18 : f32 to vector<24x64xf32>
    %65 = arith.maximumf %63, %64 : vector<24x64xf32>
    %cst_19 = arith.constant 0xFF800000 : f32
    %66 = vector.broadcast %cst_19 : f32 to vector<4x66xf32>
    %c0_20 = arith.constant 0 : index
    %c0_21 = arith.constant 0 : index
    %67 = vector.load %arg8[%c0_20, %c0_21] : memref<4x66xf32, #tpu.memory_space<vmem>>, vector<4x66xf32>
    tpu.vector_store %arg8[%c0_20, %c0_21], %66 {strides = array<i32>} : memref<4x66xf32, #tpu.memory_space<vmem>>, vector<4x66xf32>,
    %c0_22 = arith.constant 0 : index
    %c1 = arith.constant 1 : index
    %68 = vector.load %arg8[%c0_22, %c1] : memref<4x66xf32, #tpu.memory_space<vmem>>, vector<4x64xf32>
    tpu.vector_store %arg8[%c0_22, %c1], %1 {strides = array<i32>} : memref<4x66xf32, #tpu.memory_space<vmem>>, vector<4x64xf32>,
    %c0_23 = arith.constant 0 : index
    %c0_24 = arith.constant 0 : index
    %69 = vector.load %arg8[%c0_23, %c0_24] : memref<4x66xf32, #tpu.memory_space<vmem>>, vector<4x66xf32>
    %70 = vector.extract_strided_slice %69 {offsets = [0, 0], sizes = [4, 64], strides = [1, 1]} : vector<4x66xf32> to vector<4x64xf32>
    %71 = vector.extract_strided_slice %69 {offsets = [0, 1], sizes = [4, 64], strides = [1, 1]} : vector<4x66xf32> to vector<4x64xf32>
    %72 = arith.maximumf %70, %71 : vector<4x64xf32>
    %73 = vector.extract_strided_slice %69 {offsets = [0, 2], sizes = [4, 64], strides = [1, 1]} : vector<4x66xf32> to vector<4x64xf32>
    %74 = arith.maximumf %72, %73 : vector<4x64xf32>
    %c0_25 = arith.constant 0 : index
    %c0_26 = arith.constant 0 : index
    %75 = vector.load %arg2[%c0_25, %c0_26] : memref<8x4xf32, #tpu.memory_space<vmem>>, vector<8x4xf32>
    %cst_27 = arith.constant dense<0.000000e+00> : vector<8x64xf32>
    %76 = tpu.matmul %75, %74, %cst_27 {dimension_numbers = #tpu.dot_dimension_numbers<[1], [0], [0], [1], [0, 0, 1, 1], [], []>} : vector<8x4xf32>, vector<4x64xf32>, vector<8x64xf32> -> vector<8x64xf32>
    %c0_28 = arith.constant 0 : index
    %c0_29 = arith.constant 0 : index
    %77 = vector.load %arg3[%c0_28, %c0_29] : memref<8x1xf32, #tpu.memory_space<vmem>>, vector<8x1xf32>
    %78 = vector.broadcast %77 : vector<8x1xf32> to vector<8x64xf32>
    %79 = arith.addf %76, %78 : vector<8x64xf32>
    %cst_30 = arith.constant 0.000000e+00 : f32
    %80 = vector.broadcast %cst_30 : f32 to vector<8x64xf32>
    %81 = arith.maximumf %79, %80 : vector<8x64xf32>
    %82 = tpu.concatenate %65, %81 in 0 : vector<24x64xf32>, vector<8x64xf32> -> vector<32x64xf32>
    %c0_31 = arith.constant 0 : index
    %c0_32 = arith.constant 0 : index
    %c0_33 = arith.constant 0 : index
    %83 = vector.load %arg6[%c0_31, %c0_32, %c0_33] : memref<1x32x64xf32, #tpu.memory_space<vmem>>, vector<1x32x64xf32>
    %84 = vector.shape_cast %83 : vector<1x32x64xf32> to vector<32x64xf32>
    %85 = vector.shape_cast %82 : vector<32x64xf32> to vector<1x32x64xf32>
    tpu.vector_store %arg6[%c0_31, %c0_32, %c0_33], %85 {strides = array<i32>} : memref<1x32x64xf32, #tpu.memory_space<vmem>>, vector<1x32x64xf32>,
    return
  }
  func.func @transform_0(%arg0: i32) -> (i32, i32, i32) {
    %c0_i32 = arith.constant 0 : i32
    %c0_i32_0 = arith.constant 0 : i32
    %c0_i32_1 = arith.constant 0 : i32
    return %arg0, %c0_i32, %c0_i32_0 : i32, i32, i32
  }
  func.func @transform_1(%arg0: i32) -> (i32, i32) {
    %c0_i32 = arith.constant 0 : i32
    %c0_i32_0 = arith.constant 0 : i32
    %c0_i32_1 = arith.constant 0 : i32
    return %c0_i32, %c0_i32_0 : i32, i32
  }
  func.func @transform_2(%arg0: i32) -> (i32, i32) {
    %c0_i32 = arith.constant 0 : i32
    %c0_i32_0 = arith.constant 0 : i32
    %c0_i32_1 = arith.constant 0 : i32
    return %c0_i32, %c0_i32_0 : i32, i32
  }
  func.func @transform_3(%arg0: i32) -> (i32, i32) {
    %c0_i32 = arith.constant 0 : i32
    %c0_i32_0 = arith.constant 0 : i32
    %c0_i32_1 = arith.constant 0 : i32
    return %c0_i32, %c0_i32_0 : i32, i32
  }
  func.func @transform_4(%arg0: i32) -> (i32, i32) {
    %c0_i32 = arith.constant 0 : i32
    %c0_i32_0 = arith.constant 0 : i32
    %c0_i32_1 = arith.constant 0 : i32
    return %c0_i32, %c0_i32_0 : i32, i32
  }
  func.func @transform_5(%arg0: i32) -> (i32, i32, i32) {
    %c0_i32 = arith.constant 0 : i32
    %c0_i32_0 = arith.constant 0 : i32
    %c0_i32_1 = arith.constant 0 : i32
    return %arg0, %c0_i32, %c0_i32_0 : i32, i32, i32
  }
}

</mosaic_0001>

<llo_original>
// kernel: inception_forward.1
$region0: #{inception_forward.1}
  #allocation0 [shape = 'u32[]', space=smem, size = 0x4, offset = 0x4, fixed_abs, tag = 'smem constant byte address 0x4 - core index']
  #allocation1 [shape = 'u32[144,128]{1,0:T(1,128)}', space=vmem, size = 0x12000, scoped, tag = 'internal scratch']
  #allocation2 [shape = 'f32[8,104]{1,0:T(8,128)}', space=vmem, size = 0x1000, scoped, tag = 'scratch operand']
  #allocation3 [shape = 'f32[4,66]{1,0:T(4,128)}', space=vmem, size = 0x800, scoped, tag = 'scratch operand']
  %s0 = inlined_call_operand.vmem [shape: f32[2,4,64], index: 0, kind: input, shape index: {}]
  %s1 = inlined_call_operand.vmem [shape: f32[8,4], index: 1, kind: input, shape index: {}]
  %s2 = inlined_call_operand.vmem [shape: f32[8,1], index: 2, kind: input, shape index: {}]
  %s3 = inlined_call_operand.vmem [shape: bf16[24,328], index: 3, kind: input, shape index: {}]
  %s4 = inlined_call_operand.vmem [shape: f32[24,1], index: 4, kind: input, shape index: {}]
  %s5 = inlined_call_operand.hbm [shape: f32[2,32,64], index: 5, kind: output, shape index: {}]
  %s6 = sld [smem:[#allocation0]]
  $region53: #{inception_forward.1} parent=0
    _
  %s8 = ssub.s32 1, %s6
  %s9 = scalar_select 0, %s8, %s6
  $region1: #{inception_forward.1} parent=0
    #allocation4 [shape = 'u8[32768]{0}', space=vmem, size = 0x8000, scoped, tag = 'output window, operand 0']
    #allocation5 [shape = 's32[2]{0}', space=sflag, size = 0x8, scoped, tag = 'scoped memory for inception_forward.1']
    %10 = vsyncpa [#allocation5], 0
    %s11 = scalar_lea.sflag [#allocation5], 1
    %12 = vsyncpa %s11, 0
    loop: start=0, step=1, limit=4
    $region2: #{inception_forward.1} parent=1 // loop_pre_header
      _
    $region3: #{inception_forward.1} parent=1 // loop_header
      %s14 = sphi 0, %s18
      %p15 = scmp.ge.s32.totalorder %s14, 4
      %s24 = sphi 0, %s26
      %s27 = sphi 0, %s24
      %s28 = sphi 0, %s27
      %s44 = sphi 0, %s28
      %s48 = sphi 0, %s48
      %s50 = sphi 0, %s48
      %s51 = sphi 0, %s50
      %s65 = sphi 0, %s51
      %s69 = sphi 0, %s69
      %s71 = sphi 0, %s69
      %s72 = sphi 0, %s71
      %s86 = sphi 0, %s72
      %s90 = sphi 0, %s90
      %s92 = sphi 0, %s90
      %s93 = sphi 0, %s92
      %s107 = sphi 0, %s93
      %s111 = sphi 0, %s111
      %s113 = sphi 0, %s111
      %s114 = sphi 0, %s113
      %s128 = sphi 0, %s114
      %s134 = sphi 0, %s136
      %s137 = sphi 0, %s134
      %s138 = sphi 0, %s137
      %s154 = sphi 0, %s138
    $region4: #{inception_forward.1} parent=1 // loop_header_branch
      %17 = sbr.rel (%p15) target = $region8
    $region5: #{inception_forward.1} parent=1 // loop_body
      %s19 = ssub.s32 %s14, 1
      %s20 = ssub.s32 %s14, 2
      %s21 = sadd.s32 %s14, 1
      %s22 = ssub.s32 %s14, %s21
      %p23 = scmp.eq.s32.totalorder %s22, 0
      %s25 = sadd.s32 %s24, 1
      %s26 = scalar_select %p23, %s24, %s25
      %p29 = pneg %p23
      %p30 = scmp.eq.s32.totalorder %s14, 1
      %p31 = por %p29, %p30
      %p32 = scmp.ne.s32.totalorder %s24, %s27
      %p33 = scmp.eq.s32.totalorder %s14, 0
      %p34 = por %p32, %p33
      %p35 = scmp.ne.s32.totalorder %s24, %s27
      %p36 = scmp.eq.s32.totalorder %s19, 1
      %p37 = por %p35, %p36
      %p38 = scmp.ne.s32.totalorder %s27, %s28
      %p39 = scmp.eq.s32.totalorder %s19, 0
      %p40 = por %p38, %p39
      %p41 = scmp.ne.s32.totalorder %s27, %s28
      %p42 = scmp.eq.s32.totalorder %s20, 1
      %p43 = por %p41, %p42
      %p45 = scmp.ne.s32.totalorder %s28, %s44
      %p46 = scmp.eq.s32.totalorder %s20, 0
      %p47 = por %p45, %p46
      %s49 = sadd.s32 %s48, 1
      %p52 = scmp.eq.s32.totalorder %s14, 1
      %p53 = scmp.ne.s32.totalorder %s48, %s50
      %p54 = scmp.eq.s32.totalorder %s14, 0
      %p55 = por %p53, %p54
      %p56 = scmp.ne.s32.totalorder %s48, %s50
      %p57 = scmp.eq.s32.totalorder %s19, 1
      %p58 = por %p56, %p57
      %p59 = scmp.ne.s32.totalorder %s50, %s51
      %p60 = scmp.eq.s32.totalorder %s19, 0
      %p61 = por %p59, %p60
      %p62 = scmp.ne.s32.totalorder %s50, %s51
      %p63 = scmp.eq.s32.totalorder %s20, 1
      %p64 = por %p62, %p63
      %p66 = scmp.ne.s32.totalorder %s51, %s65
      %p67 = scmp.eq.s32.totalorder %s20, 0
      %p68 = por %p66, %p67
      %s70 = sadd.s32 %s69, 1
      %p73 = scmp.eq.s32.totalorder %s14, 1
      %p74 = scmp.ne.s32.totalorder %s69, %s71
      %p75 = scmp.eq.s32.totalorder %s14, 0
      %p76 = por %p74, %p75
      %p77 = scmp.ne.s32.totalorder %s69, %s71
      %p78 = scmp.eq.s32.totalorder %s19, 1
      %p79 = por %p77, %p78
      %p80 = scmp.ne.s32.totalorder %s71, %s72
      %p81 = scmp.eq.s32.totalorder %s19, 0
      %p82 = por %p80, %p81
      %p83 = scmp.ne.s32.totalorder %s71, %s72
      %p84 = scmp.eq.s32.totalorder %s20, 1
      %p85 = por %p83, %p84
      %p87 = scmp.ne.s32.totalorder %s72, %s86
      %p88 = scmp.eq.s32.totalorder %s20, 0
      %p89 = por %p87, %p88
      %s91 = sadd.s32 %s90, 1
      %p94 = scmp.eq.s32.totalorder %s14, 1
      %p95 = scmp.ne.s32.totalorder %s90, %s92
      %p96 = scmp.eq.s32.totalorder %s14, 0
      %p97 = por %p95, %p96
      %p98 = scmp.ne.s32.totalorder %s90, %s92
      %p99 = scmp.eq.s32.totalorder %s19, 1
      %p100 = por %p98, %p99
      %p101 = scmp.ne.s32.totalorder %s92, %s93
      %p102 = scmp.eq.s32.totalorder %s19, 0
      %p103 = por %p101, %p102
      %p104 = scmp.ne.s32.totalorder %s92, %s93
      %p105 = scmp.eq.s32.totalorder %s20, 1
      %p106 = por %p104, %p105
      %p108 = scmp.ne.s32.totalorder %s93, %s107
      %p109 = scmp.eq.s32.totalorder %s20, 0
      %p110 = por %p108, %p109
      %s112 = sadd.s32 %s111, 1
      %p115 = scmp.eq.s32.totalorder %s14, 1
      %p116 = scmp.ne.s32.totalorder %s111, %s113
      %p117 = scmp.eq.s32.totalorder %s14, 0
      %p118 = por %p116, %p117
      %p119 = scmp.ne.s32.totalorder %s111, %s113
      %p120 = scmp.eq.s32.totalorder %s19, 1
      %p121 = por %p119, %p120
      %p122 = scmp.ne.s32.totalorder %s113, %s114
      %p123 = scmp.eq.s32.totalorder %s19, 0
      %p124 = por %p122, %p123
      %p125 = scmp.ne.s32.totalorder %s113, %s114
      %p126 = scmp.eq.s32.totalorder %s20, 1
      %p127 = por %p125, %p126
      %p129 = scmp.ne.s32.totalorder %s114, %s128
      %p130 = scmp.eq.s32.totalorder %s20, 0
      %p131 = por %p129, %p130
      %s132 = ssub.s32 %s14, %s21
      %p133 = scmp.eq.s32.totalorder %s132, 0
      %s135 = sadd.s32 %s134, 1
      %s136 = scalar_select %p133, %s134, %s135
      %p139 = pneg %p133
      %p140 = scmp.eq.s32.totalorder %s14, 1
      %p141 = por %p139, %p140
      %p142 = scmp.ne.s32.totalorder %s134, %s137
      %p143 = scmp.eq.s32.totalorder %s14, 0
      %p144 = por %p142, %p143
      %p145 = scmp.ne.s32.totalorder %s134, %s137
      %p146 = scmp.eq.s32.totalorder %s19, 1
      %p147 = por %p145, %p146
      %p148 = scmp.ne.s32.totalorder %s137, %s138
      %p149 = scmp.eq.s32.totalorder %s19, 0
      %p150 = por %p148, %p149
      %p151 = scmp.ne.s32.totalorder %s137, %s138
      %p152 = scmp.eq.s32.totalorder %s20, 1
      %p153 = por %p151, %p152
      %p155 = scmp.ne.s32.totalorder %s138, %s154
      %p156 = scmp.eq.s32.totalorder %s20, 0
      %p157 = por %p155, %p156
      %p158 = scmp.le.s32.totalorder 1, %s14
      %p159 = scmp.lt.s32.totalorder %s14, 3
      %p160 = pnand %p158, %p159
      %p161 = pneg %p160
      // Predicated region
      $region9: #{inception_forward.1} parent=5 // pred_check
        _
      $region10: #{inception_forward.1} parent=5 // pred_check_branch
        %163 = sbr.rel (%p160) target = $region12
      $region11: #{inception_forward.1} parent=5 // pred_region
        %s164 = ssub.s32 %s14, 1
        // Predicated region
        $region13: #{inception_forward.1} parent=11 // pred_check
          %p165 = pneg %p61
        $region14: #{inception_forward.1} parent=11 // pred_check_branch
          %167 = sbr.rel (%p165) target = $region16
        $region15: #{inception_forward.1} parent=11 // pred_region
          _
        $region16: #{inception_forward.1} parent=11 // pred_fallthru
          _
        // Predicated region
        $region17: #{inception_forward.1} parent=11 // pred_check
          %p168 = pneg %p82
        $region18: #{inception_forward.1} parent=11 // pred_check_branch
          %170 = sbr.rel (%p168) target = $region20
        $region19: #{inception_forward.1} parent=11 // pred_region
          _
        $region20: #{inception_forward.1} parent=11 // pred_fallthru
          _
        // Predicated region
        $region21: #{inception_forward.1} parent=11 // pred_check
          %p171 = pneg %p103
        $region22: #{inception_forward.1} parent=11 // pred_check_branch
          %173 = sbr.rel (%p171) target = $region24
        $region23: #{inception_forward.1} parent=11 // pred_region
          _
        $region24: #{inception_forward.1} parent=11 // pred_fallthru
          _
        // Predicated region
        $region25: #{inception_forward.1} parent=11 // pred_check
          %p174 = pneg %p124
        $region26: #{inception_forward.1} parent=11 // pred_check_branch
          %176 = sbr.rel (%p174) target = $region28
        $region27: #{inception_forward.1} parent=11 // pred_region
          _
        $region28: #{inception_forward.1} parent=11 // pred_fallthru
          _
      $region12: #{inception_forward.1} parent=5 // pred_fallthru
        _
      %p177 = scmp.lt.s32.totalorder %s14, 2
      // Predicated region
      $region29: #{inception_forward.1} parent=5 // pred_check
        %p178 = pneg %p177
      $region30: #{inception_forward.1} parent=5 // pred_check_branch
        %180 = sbr.rel (%p178) target = $region32
      $region31: #{inception_forward.1} parent=5 // pred_region
        // Predicated region
        $region33: #{inception_forward.1} parent=31 // pred_check
          %p181 = pneg %p34
        $region34: #{inception_forward.1} parent=31 // pred_check_branch
          %183 = sbr.rel (%p181) target = $region36
        $region35: #{inception_forward.1} parent=31 // pred_region
          %p184 = scmp.lt.s32.totalorder %s14, 1
          %s185 = scalar_select %p184, %s14, 1
          %s186 = smul.addr %s185, 4
          %s187 = scalar_lea.vmem %s0, %s186
        $region36: #{inception_forward.1} parent=31 // pred_fallthru
          _
      $region32: #{inception_forward.1} parent=5 // pred_fallthru
        _
      %p188 = scmp.le.s32.totalorder 1, %s14
      %p189 = scmp.lt.s32.totalorder %s14, 3
      %p190 = pnand %p188, %p189
      %p191 = pneg %p190
      // Predicated region
      $region37: #{inception_forward.1} parent=5 // pred_check
        _
      $region38: #{inception_forward.1} parent=5 // pred_check_branch
        %193 = sbr.rel (%p190) target = $region40
      $region39: #{inception_forward.1} parent=5 // pred_region
        %s194 = ssub.s32 %s14, 1
        %p195 = scmp.lt.s32.totalorder %s19, 1
        %s196 = scalar_select %p195, %s19, 1
        %s197 = smul.addr %s196, 4
        %s198 = scalar_lea.vmem %s0, %s197
        %p199 = pneg %p40
        %p200 = pneg %p37
        %p201 = pneg %p61
        %p202 = pneg %p58
        %p203 = pneg %p82
        %p204 = pneg %p79
        %p205 = pneg %p103
        %p206 = pneg %p100
        %p207 = pneg %p124
        %p208 = pneg %p121
        %p209 = pneg %p150
        %p210 = pneg %p147
        %s211 = sand.u32 %s137, 1
        %s212 = scalar_lea.sflag [#allocation5], %s211
        %s213 = sand.u32 %s137, 1
        %s214 = smul.addr %s213, 32
        %s215 = scalar_lea.vmem [#allocation4], %s214
        %p216 = scmp.lt.s32.totalorder %s19, 1
        %s217 = scalar_select %p216, %s19, 1
        %s218 = smul.addr %s217, 4
        %s219 = scalar_lea.vmem %s0, %s218
        %v221 = vld [vmem:[%s219] sm:$0xf]
        %v222 = vld [vmem:[%s1] sm:$0xff]
        %v223 = vld [vmem:[%s2] sm:$0xff]
        %225 = vset.pattern.permute.xlu0 0
        %226 = vperm.xlu0 %225, %v223
        %v227 = vpop.permute.xlu0 %226
        %vm229 = vcmask 31744
        %v231 = vsel %vm229, %v222, 0
        %vm233 = vcmask 1043456
        %v235 = vsel %vm233, %v221, 0
        %237 = vmatprep.subr.mxu0 0.0
        %238 = vmatpush1.msra.mxu0 %v235
        %239 = vmatprep.subr.mxu0 0.0
        %240 = vmatpush1.msra.mxu0 0.0
        %241 = vmatprep.subr.mxu0 0.0
        %242 = vmatpush1.msra.mxu0 0.0
        %243 = vmatprep.subr.mxu0 0.0
        %244 = vmatpush1.msra.mxu0 0.0
        %245 = vmatprep.subr.mxu0 0.0
        %246 = vmatpush1.msra.mxu0 0.0
        %247 = vmatprep.subr.mxu0 0.0
        %248 = vmatpush1.msra.mxu0 0.0
        %249 = vmatprep.subr.mxu0 0.0
        %250 = vmatpush1.msra.mxu0 0.0
        %251 = vmatprep.subr.mxu0 0.0
        %252 = vmatpush1.msra.mxu0 0.0
        %253 = vmatprep.subr.mxu0 0.0
        %254 = vmatpush1.msra.mxu0 0.0
        %255 = vmatprep.subr.mxu0 0.0
        %256 = vmatpush1.msra.mxu0 0.0
        %257 = vmatprep.subr.mxu0 0.0
        %258 = vmatpush1.msra.mxu0 0.0
        %259 = vmatprep.subr.mxu0 0.0
        %260 = vmatpush1.msra.mxu0 0.0
        %261 = vmatprep.subr.mxu0 0.0
        %262 = vmatpush1.msra.mxu0 0.0
        %263 = vmatprep.subr.mxu0 0.0
        %264 = vmatpush1.msra.mxu0 0.0
        %265 = vmatprep.subr.mxu0 0.0
        %266 = vmatpush1.msra.mxu0 0.0
        %267 = vmatprep.subr.mxu0 0.0
        %268 = vmatpush1.msra.mxu0 0.0
        %269 = vmatprep.subr.mxu0 0.0
        %270 = vmatpush1.msra.mxu0 0.0
        %271 = vmatprep.subr.mxu0 0.0
        %272 = vmatpush1.msra.mxu0 0.0
        %273 = vmatprep.subr.mxu0 0.0
        %274 = vmatpush1.msra.mxu0 0.0
        %275 = vmatprep.subr.mxu0 0.0
        %276 = vmatpush1.msra.mxu0 0.0
        %277 = vmatprep.subr.mxu0 0.0
        %278 = vmatpush1.msra.mxu0 0.0
        %279 = vmatprep.subr.mxu0 0.0
        %280 = vmatpush1.msra.mxu0 0.0
        %281 = vmatprep.subr.mxu0 0.0
        %282 = vmatpush1.msra.mxu0 0.0
        %283 = vmatprep.subr.mxu0 0.0
        %284 = vmatpush1.msra.mxu0 0.0
        %285 = vmatprep.subr.mxu0 0.0
        %286 = vmatpush1.msra.mxu0 0.0
        %287 = vmatprep.subr.mxu0 0.0
        %288 = vmatpush1.msra.mxu0 0.0
        %289 = vmatprep.subr.mxu0 0.0
        %290 = vmatpush1.msra.mxu0 0.0
        %291 = vmatprep.subr.mxu0 0.0
        %292 = vmatpush1.msra.mxu0 0.0
        %293 = vmatprep.subr.mxu0 0.0
        %294 = vmatpush1.msra.mxu0 0.0
        %295 = vmatprep.subr.mxu0 0.0
        %296 = vmatpush1.msra.mxu0 0.0
        %297 = vmatprep.subr.mxu0 0.0
        %298 = vmatpush1.msra.mxu0 0.0
        %299 = vmatprep.subr.mxu0 0.0
        %300 = vmatpush1.msra.mxu0 0.0
        %301 = vmatprep.mubr.f32.mxu0 0.0
        %302 = vmatmul.mubr.f32.gmra.mrb[0].mxu0 %v231
        %v303 = vpop.f32.mrb[0].mxu0
        %v304 = vadd.f32 %v227, %v303
        %v305 = vpop.f32.mrb[0].mxu0
        %306 = vdwg.mxu0
        %v307 = vmax.f32 %v304, 0.0
        %vm308 = vcmask 850944
        %309 = vst.msk [vmem:[#allocation2] sm:$0xff] %vm308, 0.0
        %311 = vrot.lane.b32.xlu0 %v307, 20
        %v312 = vpop.permute.xlu0 %311
        %vm314 = vcmask 687264
        %315 = vst.msk [vmem:[#allocation2] sm:$0xff] %vm314, %v312
        %v316 = vld [vmem:[#allocation2] sm:$0xff]
        %318 = vrot.lane.b32.xlu0 %v316, 127
        %v319 = vpop.permute.xlu0 %318
        %321 = vrot.lane.b32.xlu0 %v316, 126
        %v322 = vpop.permute.xlu0 %321
        %324 = vrot.lane.b32.xlu0 %v316, 125
        %v325 = vpop.permute.xlu0 %324
        %327 = vrot.lane.b32.xlu0 %v316, 124
        %v328 = vpop.permute.xlu0 %327
        %330 = vrot.lane.b32.xlu0 %v316, 123
        %v331 = vpop.permute.xlu0 %330
        %333 = vrot.lane.b32.xlu0 %v316, 122
        %v334 = vpop.permute.xlu0 %333
        %336 = vrot.lane.b32.xlu0 %v316, 121
        %v337 = vpop.permute.xlu0 %336
        %339 = vrot.lane.b32.xlu0 %v316, 120
        %v340 = vpop.permute.xlu0 %339
        %342 = vrot.lane.b32.xlu0 %v316, 119
        %v343 = vpop.permute.xlu0 %342
        %345 = vrot.lane.b32.xlu0 %v316, 118
        %v346 = vpop.permute.xlu0 %345
        %348 = vrot.lane.b32.xlu0 %v316, 117
        %v349 = vpop.permute.xlu0 %348
        %351 = vrot.lane.b32.xlu0 %v316, 116
        %v352 = vpop.permute.xlu0 %351
        %354 = vrot.lane.b32.xlu0 %v316, 115
        %v355 = vpop.permute.xlu0 %354
        %357 = vrot.lane.b32.xlu0 %v316, 114
        %v358 = vpop.permute.xlu0 %357
        %360 = vrot.lane.b32.xlu0 %v316, 113
        %v361 = vpop.permute.xlu0 %360
        %363 = vrot.lane.b32.xlu0 %v316, 112
        %v364 = vpop.permute.xlu0 %363
        %365 = vrot.lane.b32.xlu0 %v319, 112
        %v366 = vpop.permute.xlu0 %365
        %367 = vrot.lane.b32.xlu0 %v322, 112
        %v368 = vpop.permute.xlu0 %367
        %369 = vrot.lane.b32.xlu0 %v325, 112
        %v370 = vpop.permute.xlu0 %369
        %371 = vrot.lane.b32.xlu0 %v328, 112
        %v372 = vpop.permute.xlu0 %371
        %373 = vrot.lane.b32.xlu0 %v331, 112
        %v374 = vpop.permute.xlu0 %373
        %375 = vrot.lane.b32.xlu0 %v334, 112
        %v376 = vpop.permute.xlu0 %375
        %377 = vrot.lane.b32.xlu0 %v337, 112
        %v378 = vpop.permute.xlu0 %377
        %379 = vrot.lane.b32.xlu0 %v340, 112
        %v380 = vpop.permute.xlu0 %379
        %381 = vrot.lane.b32.xlu0 %v343, 112
        %v382 = vpop.permute.xlu0 %381
        %383 = vrot.lane.b32.xlu0 %v346, 112
        %v384 = vpop.permute.xlu0 %383
        %385 = vrot.lane.b32.xlu0 %v349, 112
        %v386 = vpop.permute.xlu0 %385
        %387 = vrot.lane.b32.xlu0 %v352, 112
        %v388 = vpop.permute.xlu0 %387
        %389 = vrot.lane.b32.xlu0 %v355, 112
        %v390 = vpop.permute.xlu0 %389
        %391 = vrot.lane.b32.xlu0 %v358, 112
        %v392 = vpop.permute.xlu0 %391
        %393 = vrot.lane.b32.xlu0 %v361, 112
        %v394 = vpop.permute.xlu0 %393
        %411 = vrot.lane.b32.xlu0 %v316, 96
        %v412 = vpop.permute.xlu0 %411
        %413 = vrot.lane.b32.xlu0 %v319, 96
        %v414 = vpop.permute.xlu0 %413
        %415 = vrot.lane.b32.xlu0 %v322, 96
        %v416 = vpop.permute.xlu0 %415
        %417 = vrot.lane.b32.xlu0 %v325, 96
        %v418 = vpop.permute.xlu0 %417
        %419 = vrot.lane.b32.xlu0 %v328, 96
        %v420 = vpop.permute.xlu0 %419
        %421 = vrot.lane.b32.xlu0 %v331, 96
        %v422 = vpop.permute.xlu0 %421
        %423 = vrot.lane.b32.xlu0 %v334, 96
        %v424 = vpop.permute.xlu0 %423
        %425 = vrot.lane.b32.xlu0 %v337, 96
        %v426 = vpop.permute.xlu0 %425
        %427 = vrot.lane.b32.xlu0 %v340, 96
        %v428 = vpop.permute.xlu0 %427
        %v438 = vld [vmem:[%s3] sm:$0xff]
        %v439 = vld [vmem:[%s3 + $0x8] sm:$0xf]
        %v440 = vld [vmem:[%s3 + $0xc] sm:$0xff]
        %v441 = vld [vmem:[%s3 + $0x14] sm:$0xf]
        %v442 = vld [vmem:[%s3 + $0x18] sm:$0xff]
        %v443 = vld [vmem:[%s3 + $0x20] sm:$0xf]
        %v444 = vpack.c.bf16 %v319, %v316
        %v445 = vpack.c.bf16 %v325, %v322
        %v446 = vpack.c.bf16 %v331, %v328
        %v447 = vpack.c.bf16 %v337, %v334
        %v448 = vpack.c.bf16 %v343, %v340
        %v449 = vpack.c.bf16 %v349, %v346
        %v450 = vpack.c.bf16 %v355, %v352
        %v451 = vpack.c.bf16 %v361, %v358
        %v452 = vpack.c.bf16 %v366, %v364
        %v453 = vpack.c.bf16 %v370, %v368
        %v454 = vpack.c.bf16 %v374, %v372
        %v455 = vpack.c.bf16 %v378, %v376
        %v456 = vpack.c.bf16 %v382, %v380
        %v457 = vpack.c.bf16 %v386, %v384
        %v458 = vpack.c.bf16 %v390, %v388
        %v459 = vpack.c.bf16 %v394, %v392
        %v460 = vpack.c.bf16 %v414, %v412
        %v461 = vpack.c.bf16 %v418, %v416
        %v462 = vpack.c.bf16 %v422, %v420
        %v463 = vpack.c.bf16 %v426, %v424
        %v464 = vpack.c.bf16 %v428, %v428
        %v465 = vld [vmem:[%s4] sm:$0xff]
        %v466 = vld [vmem:[%s4 + $0x8] sm:$0xff]
        %v467 = vld [vmem:[%s4 + $0x10] sm:$0xff]
        %469 = vset.pattern.permute.xlu0 0
        %470 = vperm.xlu0 %469, %v465
        %v471 = vpop.permute.xlu0 %470
        %474 = vset.pattern.permute.xlu0 0
        %475 = vperm.xlu0 %474, %v466
        %v476 = vpop.permute.xlu0 %475
        %479 = vset.pattern.permute.xlu0 0
        %480 = vperm.xlu0 %479, %v467
        %v481 = vpop.permute.xlu0 %480
        %v489 = vunpack.c.l.b16 %v438
        %v490 = vunpack.c.h.b16 %v438
        %v491 = vunpack.c.l.b16 %v439
        %v492 = vunpack.c.l.b16 %v440
        %v493 = vunpack.c.h.b16 %v440
        %v494 = vunpack.c.l.b16 %v441
        %v495 = vunpack.c.l.b16 %v442
        %v496 = vunpack.c.h.b16 %v442
        %v497 = vunpack.c.l.b16 %v443
        %v498 = vpack.c.b16 %v492, %v489
        %v499 = vpack.c.b16 %v493, %v490
        %v500 = vpack.c.b16 %v494, %v491
        %v501 = vpack.c.b16 %v495, %v495
        %v502 = vpack.c.b16 %v496, %v496
        %v503 = vpack.c.b16 %v497, %v497
        %vm508 = vcmask 588800
        %v510 = vsel %vm508, %v500, 0
        %v513 = vsel %vm508, %v503, 0
        %v516 = vsel %vm233, %v464, 0
        %518 = vmatprep.subr.bf16.mxu0 0
        %519 = vmatpush1.bf16.msra.mxu0 %v444
        %520 = vmatprep.subr.bf16.mxu0 0
        %521 = vmatpush1.bf16.msra.mxu0 %v445
        %522 = vmatprep.subr.bf16.mxu0 0
        %523 = vmatpush1.bf16.msra.mxu0 %v446
        %524 = vmatprep.subr.bf16.mxu0 0
        %525 = vmatpush1.bf16.msra.mxu0 %v447
        %526 = vmatprep.subr.bf16.mxu0 0
        %527 = vmatpush1.bf16.msra.mxu0 %v448
        %528 = vmatprep.subr.bf16.mxu0 0
        %529 = vmatpush1.bf16.msra.mxu0 %v449
        %530 = vmatprep.subr.bf16.mxu0 0
        %531 = vmatpush1.bf16.msra.mxu0 %v450
        %532 = vmatprep.subr.bf16.mxu0 0
        %533 = vmatpush1.bf16.msra.mxu0 %v451
        %534 = vmatprep.subr.bf16.mxu0 0
        %535 = vmatpush1.bf16.msra.mxu0 %v452
        %536 = vmatprep.subr.bf16.mxu0 0
        %537 = vmatpush1.bf16.msra.mxu0 %v453
        %538 = vmatprep.subr.bf16.mxu0 0
        %539 = vmatpush1.bf16.msra.mxu0 %v454
        %540 = vmatprep.subr.bf16.mxu0 0
        %541 = vmatpush1.bf16.msra.mxu0 %v455
        %542 = vmatprep.subr.bf16.mxu0 0
        %543 = vmatpush1.bf16.msra.mxu0 %v456
        %544 = vmatprep.subr.bf16.mxu0 0
        %545 = vmatpush1.bf16.msra.mxu0 %v457
        %546 = vmatprep.subr.bf16.mxu0 0
        %547 = vmatpush1.bf16.msra.mxu0 %v458
        %548 = vmatprep.subr.bf16.mxu0 0
        %549 = vmatpush1.bf16.msra.mxu0 %v459
        %550 = vmatprep.mubr.bf16.mxu0 %v499
        %551 = vmatmul.mubr.bf16.gmra.mrb[0].mxu0 %v498
        %v552 = vpop.f32.mrb[0].mxu0
        %v553 = vadd.f32 %v471, %v552
        %v554 = vpop.f32.mrb[0].mxu0
        %v555 = vpop.f32.mrb[0].mxu0
        %v556 = vadd.f32 %v476, %v555
        %v557 = vpop.f32.mrb[0].mxu0
        %558 = vmatprep.mubr.bf16.mxu0 %v502
        %559 = vmatmul.mubr.bf16.gmra.mrb[0].mxu0 %v501
        %v560 = vpop.f32.mrb[0].mxu0
        %v561 = vadd.f32 %v481, %v560
        %v562 = vpop.f32.mrb[0].mxu0
        %v563 = vpop.f32.mrb[0].mxu0
        %v564 = vpop.f32.mrb[0].mxu0
        %565 = vdwg.mxu0
        %566 = vmatprep.subr.bf16.mxu0 0
        %567 = vmatpush1.bf16.msra.mxu0 %v460
        %568 = vmatprep.subr.bf16.mxu0 0
        %569 = vmatpush1.bf16.msra.mxu0 %v461
        %570 = vmatprep.subr.bf16.mxu0 0
        %571 = vmatpush1.bf16.msra.mxu0 %v462
        %572 = vmatprep.subr.bf16.mxu0 0
        %573 = vmatpush1.bf16.msra.mxu0 %v463
        %574 = vmatprep.subr.bf16.mxu0 0
        %575 = vmatpush1.bf16.msra.mxu0 %v516
        %576 = vmatprep.subr.bf16.mxu0 0
        %577 = vmatpush1.bf16.msra.mxu0 0
        %578 = vmatprep.subr.bf16.mxu0 0
        %579 = vmatpush1.bf16.msra.mxu0 0
        %580 = vmatprep.subr.bf16.mxu0 0
        %581 = vmatpush1.bf16.msra.mxu0 0
        %582 = vmatprep.subr.bf16.mxu0 0
        %583 = vmatpush1.bf16.msra.mxu0 0
        %584 = vmatprep.subr.bf16.mxu0 0
        %585 = vmatpush1.bf16.msra.mxu0 0
        %586 = vmatprep.subr.bf16.mxu0 0
        %587 = vmatpush1.bf16.msra.mxu0 0
        %588 = vmatprep.subr.bf16.mxu0 0
        %589 = vmatpush1.bf16.msra.mxu0 0
        %590 = vmatprep.subr.bf16.mxu0 0
        %591 = vmatpush1.bf16.msra.mxu0 0
        %592 = vmatprep.subr.bf16.mxu0 0
        %593 = vmatpush1.bf16.msra.mxu0 0
        %594 = vmatprep.subr.bf16.mxu0 0
        %595 = vmatpush1.bf16.msra.mxu0 0
        %596 = vmatprep.subr.bf16.mxu0 0
        %597 = vmatpush1.bf16.msra.mxu0 0
        %598 = vmatprep.mubr.bf16.mxu0 0
        %599 = vmatmul.mubr.bf16.gmra.mrb[0].mxu0 %v510
        %v600 = vpop.f32.mrb[0].mxu0
        %v601 = vadd.f32 %v553, %v600
        %v602 = vpop.f32.mrb[0].mxu0
        %v603 = vpop.f32.mrb[0].mxu0
        %v604 = vadd.f32 %v556, %v603
        %v605 = vpop.f32.mrb[0].mxu0
        %606 = vmatprep.mubr.bf16.mxu0 0
        %607 = vmatmul.mubr.bf16.gmra.mrb[0].mxu0 %v513
        %v608 = vpop.f32.mrb[0].mxu0
        %v609 = vadd.f32 %v561, %v608
        %v610 = vpop.f32.mrb[0].mxu0
        %v611 = vpop.f32.mrb[0].mxu0
        %v612 = vpop.f32.mrb[0].mxu0
        %613 = vdwg.mxu0
        %v614 = vmax.f32 %v601, 0.0
        %v615 = vmax.f32 %v604, 0.0
        %v616 = vmax.f32 %v609, 0.0
        %vm617 = vcmask 535552
        %618 = vst.msk [vmem:[#allocation3] sm:$0xf] %vm617, -inf
        %619 = vrot.lane.b32.xlu0 %v221, 1
        %v620 = vpop.permute.xlu0 %619
        %vm622 = vcmask 527368
        %623 = vst.msk [vmem:[#allocation3] sm:$0xf] %vm622, %v620
        %v624 = vld [vmem:[#allocation3] sm:$0xf]
        %626 = vrot.lane.b32.xlu0 %v624, 127
        %v627 = vpop.permute.xlu0 %626
        %v629 = vmax.f32 %v624, %v627
        %630 = vrot.lane.b32.xlu0 %v624, 126
        %v631 = vpop.permute.xlu0 %630
        %v633 = vmax.f32 %v629, %v631
        %v634 = vld [vmem:[%s1] sm:$0xff]
        %v635 = vld [vmem:[%s2] sm:$0xff]
        %637 = vset.pattern.permute.xlu0 0
        %638 = vperm.xlu0 %637, %v635
        %v639 = vpop.permute.xlu0 %638
        %v642 = vsel %vm229, %v634, 0
        %v645 = vsel %vm233, %v633, 0
        %647 = vmatprep.subr.mxu0 0.0
        %648 = vmatpush1.msra.mxu0 %v645
        %649 = vmatprep.subr.mxu0 0.0
        %650 = vmatpush1.msra.mxu0 0.0
        %651 = vmatprep.subr.mxu0 0.0
        %652 = vmatpush1.msra.mxu0 0.0
        %653 = vmatprep.subr.mxu0 0.0
        %654 = vmatpush1.msra.mxu0 0.0
        %655 = vmatprep.subr.mxu0 0.0
        %656 = vmatpush1.msra.mxu0 0.0
        %657 = vmatprep.subr.mxu0 0.0
        %658 = vmatpush1.msra.mxu0 0.0
        %659 = vmatprep.subr.mxu0 0.0
        %660 = vmatpush1.msra.mxu0 0.0
        %661 = vmatprep.subr.mxu0 0.0
        %662 = vmatpush1.msra.mxu0 0.0
        %663 = vmatprep.subr.mxu0 0.0
        %664 = vmatpush1.msra.mxu0 0.0
        %665 = vmatprep.subr.mxu0 0.0
        %666 = vmatpush1.msra.mxu0 0.0
        %667 = vmatprep.subr.mxu0 0.0
        %668 = vmatpush1.msra.mxu0 0.0
        %669 = vmatprep.subr.mxu0 0.0
        %670 = vmatpush1.msra.mxu0 0.0
        %671 = vmatprep.subr.mxu0 0.0
        %672 = vmatpush1.msra.mxu0 0.0
        %673 = vmatprep.subr.mxu0 0.0
        %674 = vmatpush1.msra.mxu0 0.0
        %675 = vmatprep.subr.mxu0 0.0
        %676 = vmatpush1.msra.mxu0 0.0
        %677 = vmatprep.subr.mxu0 0.0
        %678 = vmatpush1.msra.mxu0 0.0
        %679 = vmatprep.subr.mxu0 0.0
        %680 = vmatpush1.msra.mxu0 0.0
        %681 = vmatprep.subr.mxu0 0.0
        %682 = vmatpush1.msra.mxu0 0.0
        %683 = vmatprep.subr.mxu0 0.0
        %684 = vmatpush1.msra.mxu0 0.0
        %685 = vmatprep.subr.mxu0 0.0
        %686 = vmatpush1.msra.mxu0 0.0
        %687 = vmatprep.subr.mxu0 0.0
        %688 = vmatpush1.msra.mxu0 0.0
        %689 = vmatprep.subr.mxu0 0.0
        %690 = vmatpush1.msra.mxu0 0.0
        %691 = vmatprep.subr.mxu0 0.0
        %692 = vmatpush1.msra.mxu0 0.0
        %693 = vmatprep.subr.mxu0 0.0
        %694 = vmatpush1.msra.mxu0 0.0
        %695 = vmatprep.subr.mxu0 0.0
        %696 = vmatpush1.msra.mxu0 0.0
        %697 = vmatprep.subr.mxu0 0.0
        %698 = vmatpush1.msra.mxu0 0.0
        %699 = vmatprep.subr.mxu0 0.0
        %700 = vmatpush1.msra.mxu0 0.0
        %701 = vmatprep.subr.mxu0 0.0
        %702 = vmatpush1.msra.mxu0 0.0
        %703 = vmatprep.subr.mxu0 0.0
        %704 = vmatpush1.msra.mxu0 0.0
        %705 = vmatprep.subr.mxu0 0.0
        %706 = vmatpush1.msra.mxu0 0.0
        %707 = vmatprep.subr.mxu0 0.0
        %708 = vmatpush1.msra.mxu0 0.0
        %709 = vmatprep.subr.mxu0 0.0
        %710 = vmatpush1.msra.mxu0 0.0
        %711 = vmatprep.mubr.f32.mxu0 0.0
        %712 = vmatmul.mubr.f32.gmra.mrb[0].mxu0 %v642
        %v713 = vpop.f32.mrb[0].mxu0
        %v714 = vadd.f32 %v639, %v713
        %v715 = vpop.f32.mrb[0].mxu0
        %716 = vdwg.mxu0
        %v717 = vmax.f32 %v714, 0.0
        %vm718 = vcmask 523264
        %719 = vst.msk [vmem:[%s215] sm:$0xff] %vm718, %v614
        %720 = vst.msk [vmem:[%s215 + $0x8] sm:$0xff] %vm718, %v615
        %721 = vst.msk [vmem:[%s215 + $0x10] sm:$0xff] %vm718, %v616
        %722 = vst.msk [vmem:[%s215 + $0x18] sm:$0xff] %vm718, %v717
        %s723 = sand.u32 %s137, 1
        %s724 = scalar_lea.sflag [#allocation5], %s723
        %s725 = sand.u32 %s137, 1
        %s726 = smul.addr %s725, 32
        %s727 = scalar_lea.vmem [#allocation4], %s726
        // Predicated region
        $region41: #{inception_forward.1} parent=39 // pred_check
          %p728 = pneg %p147
        $region42: #{inception_forward.1} parent=39 // pred_check_branch
          %730 = sbr.rel (%p728) target = $region44
        $region43: #{inception_forward.1} parent=39 // pred_region
          %s732 = ssub.s32 512, 512
          %733 = vsyncadd %s724, %s732
          %s734 = smul.addr %s19, 4
          %s735 = smul.addr %s734, 128
          %s736 = scalar_lea.hbm %s5, %s735
          %s737 = sshll.u32 %s727, 4
          %s738 = int_to_ptr.vmem [resolvable:$true] %s737
          %743 = dma.vmem_to_hbm [thread:$0]  %s738, 512, %s736, %s724, 128, 128, 8
        $region44: #{inception_forward.1} parent=39 // pred_fallthru
          _
      $region40: #{inception_forward.1} parent=5 // pred_fallthru
        _
      %p744 = scmp.le.s32.totalorder 2, %s14
      // Predicated region
      $region45: #{inception_forward.1} parent=5 // pred_check
        %p745 = pneg %p744
      $region46: #{inception_forward.1} parent=5 // pred_check_branch
        %747 = sbr.rel (%p745) target = $region48
      $region47: #{inception_forward.1} parent=5 // pred_region
        %s748 = ssub.s32 %s14, 2
        // Predicated region
        $region49: #{inception_forward.1} parent=47 // pred_check
          %p749 = pneg %p153
        $region50: #{inception_forward.1} parent=47 // pred_check_branch
          %751 = sbr.rel (%p749) target = $region52
        $region51: #{inception_forward.1} parent=47 // pred_region
          %s752 = sand.u32 %s138, 1
          %s753 = scalar_lea.sflag [#allocation5], %s752
          %s754 = sand.u32 %s138, 1
          %s755 = smul.addr %s754, 32
          %s756 = scalar_lea.vmem [#allocation4], %s755
          %757 = dma.done %s753, 512
        $region52: #{inception_forward.1} parent=47 // pred_fallthru
          _
      $region48: #{inception_forward.1} parent=5 // pred_fallthru
        _
    $region6: #{inception_forward.1} parent=1 // loop_footer
      %s18 = sadd.s32 1, %s14
    $region7: #{inception_forward.1} parent=1 // loop_footer_branch
      %13 = sbr.rel target = $region3
    $region8: #{inception_forward.1} parent=1 // loop_exit
      _
    %758 = vsyncpa [#allocation5], 1
    %s759 = scalar_lea.sflag [#allocation5], 1
    %760 = vsyncpa %s759, 1

</llo_original>
